<compile_context>
chip_gen: v7x
topology: tpu7x:2x2x1
jax: 0.10.0
libtpu: 0.0.40
codegen_flags: <defaults>
</compile_context>

<pallas_src>
import jax
import jax.numpy as jnp
from jax.experimental import pallas as pl
from jax.experimental.pallas import tpu as pltpu

INPUT_DIM = 20
HIDDEN = [100, 120, 50]
OUTPUT_DIM = 2
LEAKY_SLOPE = 0.01          # nn.LeakyReLU default negative_slope

D_PAD = 128                 # hidden feature dims padded to full lane width


def credit_net_kernel(x_ref,
                      w1_ref, b1_ref,
                      w2_ref, b2_ref,
                      w3_ref, b3_ref,
                      w4_ref, b4_ref,
                      out_ref):
    # x arrives f32 (natural 20-wide last dim); cast to bf16 in-kernel for the
    # MXU (cheap VPU op, avoids an extra XLA pass over x in the wrapper).
    x = x_ref[...].astype(jnp.bfloat16)

    # fc1 + ReLU   (dropout -> identity in eval mode)
    h = jnp.dot(x, w1_ref[...], preferred_element_type=jnp.float32) + b1_ref[...]
    h = jnp.maximum(h, 0.0)

    # hidden layer 1 (100 -> 120, padded 128 -> 128) + LeakyReLU
    z = jnp.dot(h.astype(jnp.bfloat16), w2_ref[...],
                preferred_element_type=jnp.float32) + b2_ref[...]
    h = jnp.where(z > 0, z, LEAKY_SLOPE * z)

    # hidden layer 2 (120 -> 50, padded 128 -> 128) + LeakyReLU
    z = jnp.dot(h.astype(jnp.bfloat16), w3_ref[...],
                preferred_element_type=jnp.float32) + b3_ref[...]
    h = jnp.where(z > 0, z, LEAKY_SLOPE * z)

    # Output layer folded into difference form:  both lanes 0 and 1 of `d`
    # hold  l1 - l0  (same column repeated), so
    #   softmax([l0, l1]) == [1 - sigmoid(d), sigmoid(d)]
    # exactly — no lane-wide max/sum reductions, probabilities sum to 1.
    d = jnp.dot(h.astype(jnp.bfloat16), w4_ref[...],
                preferred_element_type=jnp.float32) + b4_ref[...]
    d2 = d[:, :OUTPUT_DIM]                       # (tile_b, 2), both lanes == l1-l0
    p1 = 1.0 / (1.0 + jnp.exp(-d2))              # sigmoid, EUP
    lane = jax.lax.broadcasted_iota(jnp.int32, p1.shape, 1)
    out_ref[...] = jnp.where(lane == 1, p1, 1.0 - p1)


def _round_up(x, m):
    return (x + m - 1) // m * m


def prepare_params(params):
    """Pad / cast weights once (hoisted out of the per-call hot path).

    Weights stored (in, out) in bf16 for the MXU; biases stay f32.  The output
    layer is converted to pairwise-difference form (see kernel)."""
    (w1, b1), (w2, b2), (w3, b3), (w4, b4) = params

    def pad(a, rows, cols, dtype):
        out = jnp.zeros((rows, cols), jnp.float32)
        out = out.at[:a.shape[0], :a.shape[1]].set(a.astype(jnp.float32))
        return out.astype(dtype)

    w1p = pad(w1, INPUT_DIM, D_PAD, jnp.bfloat16)   # (20, 128) — no row padding
    b1p = pad(b1, 1, D_PAD, jnp.float32)
    w2p = pad(w2, D_PAD, D_PAD, jnp.bfloat16)
    b2p = pad(b2, 1, D_PAD, jnp.float32)
    w3p = pad(w3, D_PAD, D_PAD, jnp.bfloat16)
    b3p = pad(b3, 1, D_PAD, jnp.float32)

    # Output layer: lanes 0 and 1 both get the column difference w4[:,1]-w4[:,0]
    # and bias b4[1]-b4[0]; remaining lanes are zero (ignored by the kernel).
    diff_w = (w4[:, 1] - w4[:, 0]).astype(jnp.float32)
    wd = jnp.zeros((D_PAD, D_PAD), jnp.float32)
    wd = wd.at[:w4.shape[0], 0].set(diff_w)
    wd = wd.at[:w4.shape[0], 1].set(diff_w)
    w4p = wd.astype(jnp.bfloat16)

    b4f = b4.reshape(-1).astype(jnp.float32)
    diff_b = b4f[1] - b4f[0]
    b4p = jnp.zeros((1, D_PAD), jnp.float32).at[0, 0].set(diff_b).at[0, 1].set(diff_b)

    return (w1p, b1p, w2p, b2p, w3p, b3p, w4p, b4p)


def credit_net_forward(x, prepared, *, tile_b=2048):
    B, D = x.shape
    assert D == INPUT_DIM
    w1p, b1p, w2p, b2p, w3p, b3p, w4p, b4p = prepared

    # Batch tile: multiple of 8 sublanes; capped so there are >= 2 grid steps
    # whenever the batch allows it (lets the "parallel" axis shard across both
    # TensorCores on v7x; no effect on single-TC v5e/v6e).
    tile_b = _round_up(max(8, int(tile_b)), 8)
    half = _round_up(max(8, -(-B // 2)), 8)
    tile_b = min(tile_b, half)
    n_tiles = pl.cdiv(B, tile_b)

    def full_spec(shape):
        return pl.BlockSpec(shape, lambda i: (0, 0))

    grid_spec = pl.GridSpec(
        grid=(n_tiles,),
        in_specs=[
            pl.BlockSpec((tile_b, INPUT_DIM), lambda i: (i, 0)),
            full_spec(w1p.shape), full_spec(b1p.shape),
            full_spec(w2p.shape), full_spec(b2p.shape),
            full_spec(w3p.shape), full_spec(b3p.shape),
            full_spec(w4p.shape), full_spec(b4p.shape),
        ],
        out_specs=pl.BlockSpec((tile_b, OUTPUT_DIM), lambda i: (i, 0)),
    )

    flops = 2 * B * (INPUT_DIM * HIDDEN[0] + HIDDEN[0] * HIDDEN[1]
                     + HIDDEN[1] * HIDDEN[2] + HIDDEN[2] * OUTPUT_DIM)
    weight_bytes = sum(int(a.size) * int(a.dtype.itemsize)
                       for a in (w1p, b1p, w2p, b2p, w3p, b3p, w4p, b4p))
    cost = pl.CostEstimate(
        flops=flops,
        transcendentals=B * OUTPUT_DIM,
        bytes_accessed=B * INPUT_DIM * 4 + weight_bytes + B * OUTPUT_DIM * 4,
    )

    # ~7-9 MiB actually needed at tile_b=2048 (2x-buffered x/out tiles +
    # weights + f32 intermediates); keep headroom but stay at/below the 32 MiB
    # scoped default (v7x has only 64 MiB physical VMEM).
    vmem_limit = int(min(32 * 1024 * 1024,
                         max(16 * 1024 * 1024, 12 * tile_b * D_PAD * 4)))

    return pl.pallas_call(
        credit_net_kernel,
        out_shape=jax.ShapeDtypeStruct((B, OUTPUT_DIM), jnp.float32),
        grid_spec=grid_spec,
        compiler_params=pltpu.CompilerParams(
            dimension_semantics=("parallel",),
            vmem_limit_bytes=vmem_limit,
        ),
        cost_estimate=cost,
    )(x, w1p, b1p, w2p, b2p, w3p, b3p, w4p, b4p)


def init_params(key):
    """Deterministic synthetic weights, PyTorch-Linear-like fan_in scaling.
    Weights stored as (in, out); biases stored as (1, out)."""
    dims = [INPUT_DIM] + HIDDEN + [OUTPUT_DIM]
    params = []
    for i in range(len(dims) - 1):
        fan_in, fan_out = dims[i], dims[i + 1]
        key, kw, kb = jax.random.split(key, 3)
        bound = 1.0 / jnp.sqrt(fan_in)
        w = jax.random.uniform(kw, (fan_in, fan_out), jnp.float32, -bound, bound)
        b = jax.random.uniform(kb, (1, fan_out), jnp.float32, -bound, bound)
        params.append((w, b))
    return params


def reference_forward(x, params):
    # Pure-JAX f32 reference (dropout = identity in eval mode).
    (w1, b1), (w2, b2), (w3, b3), (w4, b4) = params
    h = jnp.maximum(x @ w1 + b1, 0.0)
    z = h @ w2 + b2
    h = jnp.where(z > 0, z, LEAKY_SLOPE * z)
    z = h @ w3 + b3
    h = jnp.where(z > 0, z, LEAKY_SLOPE * z)
    logits = h @ w4 + b4
    return jax.nn.softmax(logits, axis=-1)


if __name__ == "__main__":
    key = jax.random.PRNGKey(0)
    kx, kp = jax.random.split(key)
    batch = 16
    x = jax.random.normal(kx, (batch, INPUT_DIM), jnp.float32)
    params = init_params(kp)
    prepared = prepare_params(params)   # pad/cast once, reused across calls

    out = credit_net_forward(x, prepared)
    out = jax.block_until_ready(out)

    ref = reference_forward(x, params)
    assert out.shape == (batch, OUTPUT_DIM)
    # Probabilities sum to exactly 1 by construction (p0 = 1 - p1).
    row_sum_err = float(jnp.max(jnp.abs(jnp.sum(out, axis=-1) - 1.0)))
    assert row_sum_err < 1e-5, row_sum_err
    # bf16 matmul inputs vs. an f32 reference -> loosened tolerance.
    err = float(jnp.max(jnp.abs(out - ref)))
    assert jnp.allclose(out, ref, atol=2e-2, rtol=2e-2), err
    print("KERNEL_OK")
</pallas_src>

<mosaic_0001>
module attributes {stable_mosaic.version = 11 : i64} {
  func.func @credit_net_kernel(%arg0: i32, %arg1: memref<8x20xf32, #tpu.memory_space<vmem>>, %arg2: memref<20x128xbf16, #tpu.memory_space<vmem>>, %arg3: memref<1x128xf32, #tpu.memory_space<vmem>>, %arg4: memref<128x128xbf16, #tpu.memory_space<vmem>>, %arg5: memref<1x128xf32, #tpu.memory_space<vmem>>, %arg6: memref<128x128xbf16, #tpu.memory_space<vmem>>, %arg7: memref<1x128xf32, #tpu.memory_space<vmem>>, %arg8: memref<128x128xbf16, #tpu.memory_space<vmem>>, %arg9: memref<1x128xf32, #tpu.memory_space<vmem>>, %arg10: memref<8x2xf32, #tpu.memory_space<vmem>>) attributes {dimension_semantics = [#tpu.dimension_semantics<parallel>], iteration_bounds = array<i64: 2>, scalar_prefetch = 0 : i64, scratch_operands = 0 : i64, tpu.core_type = #tpu.core_type<tc>, window_params = [{transform_indices = @transform_0, window_bounds = array<i64: 8, 20>}, {pipeline_mode = #tpu.pipeline_mode<synchronous>, transform_indices = @transform_1, window_bounds = array<i64: 20, 128>}, {pipeline_mode = #tpu.pipeline_mode<synchronous>, transform_indices = @transform_2, window_bounds = array<i64: 1, 128>}, {pipeline_mode = #tpu.pipeline_mode<synchronous>, transform_indices = @transform_3, window_bounds = array<i64: 128, 128>}, {pipeline_mode = #tpu.pipeline_mode<synchronous>, transform_indices = @transform_4, window_bounds = array<i64: 1, 128>}, {pipeline_mode = #tpu.pipeline_mode<synchronous>, transform_indices = @transform_5, window_bounds = array<i64: 128, 128>}, {pipeline_mode = #tpu.pipeline_mode<synchronous>, transform_indices = @transform_6, window_bounds = array<i64: 1, 128>}, {pipeline_mode = #tpu.pipeline_mode<synchronous>, transform_indices = @transform_7, window_bounds = array<i64: 128, 128>}, {pipeline_mode = #tpu.pipeline_mode<synchronous>, transform_indices = @transform_8, window_bounds = array<i64: 1, 128>}, {transform_indices = @transform_9, window_bounds = array<i64: 8, 2>}]} {
    %c0 = arith.constant 0 : index
    %c0_0 = arith.constant 0 : index
    %0 = vector.load %arg1[%c0, %c0_0] : memref<8x20xf32, #tpu.memory_space<vmem>>, vector<8x20xf32>
    %1 = arith.truncf %0 : vector<8x20xf32> to vector<8x20xbf16>
    %c0_1 = arith.constant 0 : index
    %c0_2 = arith.constant 0 : index
    %2 = vector.load %arg2[%c0_1, %c0_2] : memref<20x128xbf16, #tpu.memory_space<vmem>>, vector<20x128xbf16>
    %cst = arith.constant dense<0.000000e+00> : vector<8x128xf32>
    %3 = tpu.matmul %1, %2, %cst {dimension_numbers = #tpu.dot_dimension_numbers<[1], [0], [0], [1], [0, 0, 1, 1], [], []>} : vector<8x20xbf16>, vector<20x128xbf16>, vector<8x128xf32> -> vector<8x128xf32>
    %c0_3 = arith.constant 0 : index
    %c0_4 = arith.constant 0 : index
    %4 = vector.load %arg3[%c0_3, %c0_4] : memref<1x128xf32, #tpu.memory_space<vmem>>, vector<1x128xf32>
    %5 = vector.broadcast %4 : vector<1x128xf32> to vector<8x128xf32>
    %6 = arith.addf %3, %5 : vector<8x128xf32>
    %cst_5 = arith.constant 0.000000e+00 : f32
    %7 = vector.broadcast %cst_5 : f32 to vector<8x128xf32>
    %8 = arith.maximumf %6, %7 : vector<8x128xf32>
    %9 = arith.truncf %8 : vector<8x128xf32> to vector<8x128xbf16>
    %c0_6 = arith.constant 0 : index
    %c0_7 = arith.constant 0 : index
    %10 = vector.load %arg4[%c0_6, %c0_7] : memref<128x128xbf16, #tpu.memory_space<vmem>>, vector<128x128xbf16>
    %cst_8 = arith.constant dense<0.000000e+00> : vector<8x128xf32>
    %11 = tpu.matmul %9, %10, %cst_8 {dimension_numbers = #tpu.dot_dimension_numbers<[1], [0], [0], [1], [0, 0, 1, 1], [], []>} : vector<8x128xbf16>, vector<128x128xbf16>, vector<8x128xf32> -> vector<8x128xf32>
    %c0_9 = arith.constant 0 : index
    %c0_10 = arith.constant 0 : index
    %12 = vector.load %arg5[%c0_9, %c0_10] : memref<1x128xf32, #tpu.memory_space<vmem>>, vector<1x128xf32>
    %13 = vector.broadcast %12 : vector<1x128xf32> to vector<8x128xf32>
    %14 = arith.addf %11, %13 : vector<8x128xf32>
    %cst_11 = arith.constant 0.000000e+00 : f32
    %15 = vector.broadcast %cst_11 : f32 to vector<8x128xf32>
    %16 = arith.cmpf ogt, %14, %15 : vector<8x128xf32>
    %cst_12 = arith.constant 0.00999999977 : f32
    %17 = vector.broadcast %cst_12 : f32 to vector<8x128xf32>
    %18 = arith.mulf %17, %14 : vector<8x128xf32>
    %19 = arith.select %16, %14, %18 : vector<8x128xi1>, vector<8x128xf32>
    %20 = arith.truncf %19 : vector<8x128xf32> to vector<8x128xbf16>
    %c0_13 = arith.constant 0 : index
    %c0_14 = arith.constant 0 : index
    %21 = vector.load %arg6[%c0_13, %c0_14] : memref<128x128xbf16, #tpu.memory_space<vmem>>, vector<128x128xbf16>
    %cst_15 = arith.constant dense<0.000000e+00> : vector<8x128xf32>
    %22 = tpu.matmul %20, %21, %cst_15 {dimension_numbers = #tpu.dot_dimension_numbers<[1], [0], [0], [1], [0, 0, 1, 1], [], []>} : vector<8x128xbf16>, vector<128x128xbf16>, vector<8x128xf32> -> vector<8x128xf32>
    %c0_16 = arith.constant 0 : index
    %c0_17 = arith.constant 0 : index
    %23 = vector.load %arg7[%c0_16, %c0_17] : memref<1x128xf32, #tpu.memory_space<vmem>>, vector<1x128xf32>
    %24 = vector.broadcast %23 : vector<1x128xf32> to vector<8x128xf32>
    %25 = arith.addf %22, %24 : vector<8x128xf32>
    %cst_18 = arith.constant 0.000000e+00 : f32
    %26 = vector.broadcast %cst_18 : f32 to vector<8x128xf32>
    %27 = arith.cmpf ogt, %25, %26 : vector<8x128xf32>
    %cst_19 = arith.constant 0.00999999977 : f32
    %28 = vector.broadcast %cst_19 : f32 to vector<8x128xf32>
    %29 = arith.mulf %28, %25 : vector<8x128xf32>
    %30 = arith.select %27, %25, %29 : vector<8x128xi1>, vector<8x128xf32>
    %31 = arith.truncf %30 : vector<8x128xf32> to vector<8x128xbf16>
    %c0_20 = arith.constant 0 : index
    %c0_21 = arith.constant 0 : index
    %32 = vector.load %arg8[%c0_20, %c0_21] : memref<128x128xbf16, #tpu.memory_space<vmem>>, vector<128x128xbf16>
    %cst_22 = arith.constant dense<0.000000e+00> : vector<8x128xf32>
    %33 = tpu.matmul %31, %32, %cst_22 {dimension_numbers = #tpu.dot_dimension_numbers<[1], [0], [0], [1], [0, 0, 1, 1], [], []>} : vector<8x128xbf16>, vector<128x128xbf16>, vector<8x128xf32> -> vector<8x128xf32>
    %c0_23 = arith.constant 0 : index
    %c0_24 = arith.constant 0 : index
    %34 = vector.load %arg9[%c0_23, %c0_24] : memref<1x128xf32, #tpu.memory_space<vmem>>, vector<1x128xf32>
    %35 = vector.broadcast %34 : vector<1x128xf32> to vector<8x128xf32>
    %36 = arith.addf %33, %35 : vector<8x128xf32>
    %37 = vector.extract_strided_slice %36 {offsets = [0, 0], sizes = [8, 2], strides = [1, 1]} : vector<8x128xf32> to vector<8x2xf32>
    %cst_25 = arith.constant 0.000000e+00 : f32
    %38 = vector.broadcast %cst_25 : f32 to vector<8x2xf32>
    %39 = arith.subf %38, %37 : vector<8x2xf32>
    %40 = math.exp %39 : vector<8x2xf32>
    %cst_26 = arith.constant 1.000000e+00 : f32
    %41 = vector.broadcast %cst_26 : f32 to vector<8x2xf32>
    %42 = arith.addf %41, %40 : vector<8x2xf32>
    %cst_27 = arith.constant 1.000000e+00 : f32
    %43 = vector.broadcast %cst_27 : f32 to vector<8x2xf32>
    %44 = arith.divf %43, %42 : vector<8x2xf32>
    %45 = tpu.iota {dimensions = array<i32: 1>} : vector<8x2xi32>
    %c1_i32 = arith.constant 1 : i32
    %46 = vector.broadcast %c1_i32 : i32 to vector<8x2xi32>
    %47 = arith.cmpi eq, %45, %46 : vector<8x2xi32>
    %cst_28 = arith.constant 1.000000e+00 : f32
    %48 = vector.broadcast %cst_28 : f32 to vector<8x2xf32>
    %49 = arith.subf %48, %44 : vector<8x2xf32>
    %50 = arith.select %47, %44, %49 : vector<8x2xi1>, vector<8x2xf32>
    %c0_29 = arith.constant 0 : index
    %c0_30 = arith.constant 0 : index
    %51 = vector.load %arg10[%c0_29, %c0_30] : memref<8x2xf32, #tpu.memory_space<vmem>>, vector<8x2xf32>
    tpu.vector_store %arg10[%c0_29, %c0_30], %50 {strides = array<i32>} : memref<8x2xf32, #tpu.memory_space<vmem>>, vector<8x2xf32>,
    return
  }
  func.func @transform_0(%arg0: i32) -> (i32, i32) {
    %c0_i32 = arith.constant 0 : i32
    %c0_i32_0 = arith.constant 0 : i32
    return %arg0, %c0_i32 : i32, i32
  }
  func.func @transform_1(%arg0: i32) -> (i32, i32) {
    %c0_i32 = arith.constant 0 : i32
    %c0_i32_0 = arith.constant 0 : i32
    %c0_i32_1 = arith.constant 0 : i32
    return %c0_i32, %c0_i32_0 : i32, i32
  }
  func.func @transform_2(%arg0: i32) -> (i32, i32) {
    %c0_i32 = arith.constant 0 : i32
    %c0_i32_0 = arith.constant 0 : i32
    %c0_i32_1 = arith.constant 0 : i32
    return %c0_i32, %c0_i32_0 : i32, i32
  }
  func.func @transform_3(%arg0: i32) -> (i32, i32) {
    %c0_i32 = arith.constant 0 : i32
    %c0_i32_0 = arith.constant 0 : i32
    %c0_i32_1 = arith.constant 0 : i32
    return %c0_i32, %c0_i32_0 : i32, i32
  }
  func.func @transform_4(%arg0: i32) -> (i32, i32) {
    %c0_i32 = arith.constant 0 : i32
    %c0_i32_0 = arith.constant 0 : i32
    %c0_i32_1 = arith.constant 0 : i32
    return %c0_i32, %c0_i32_0 : i32, i32
  }
  func.func @transform_5(%arg0: i32) -> (i32, i32) {
    %c0_i32 = arith.constant 0 : i32
    %c0_i32_0 = arith.constant 0 : i32
    %c0_i32_1 = arith.constant 0 : i32
    return %c0_i32, %c0_i32_0 : i32, i32
  }
  func.func @transform_6(%arg0: i32) -> (i32, i32) {
    %c0_i32 = arith.constant 0 : i32
    %c0_i32_0 = arith.constant 0 : i32
    %c0_i32_1 = arith.constant 0 : i32
    return %c0_i32, %c0_i32_0 : i32, i32
  }
  func.func @transform_7(%arg0: i32) -> (i32, i32) {
    %c0_i32 = arith.constant 0 : i32
    %c0_i32_0 = arith.constant 0 : i32
    %c0_i32_1 = arith.constant 0 : i32
    return %c0_i32, %c0_i32_0 : i32, i32
  }
  func.func @transform_8(%arg0: i32) -> (i32, i32) {
    %c0_i32 = arith.constant 0 : i32
    %c0_i32_0 = arith.constant 0 : i32
    %c0_i32_1 = arith.constant 0 : i32
    return %c0_i32, %c0_i32_0 : i32, i32
  }
  func.func @transform_9(%arg0: i32) -> (i32, i32) {
    %c0_i32 = arith.constant 0 : i32
    %c0_i32_0 = arith.constant 0 : i32
    return %arg0, %c0_i32 : i32, i32
  }
}

</mosaic_0001>

<llo_original>
// kernel: tpu_custom_call.1
$region0: #{tpu_custom_call.1}
  #allocation0 [shape = 'u32[]', space=smem, size = 0x4, offset = 0x4, fixed_abs, tag = 'smem constant byte address 0x4 - core index']
  #allocation1 [shape = 'u32[144,128]{1,0:T(1,128)}', space=vmem, size = 0x12000, scoped, tag = 'internal scratch']
  %s0 = inlined_call_operand.hbm [shape: f32[16,20], index: 0, kind: input, shape index: {}]
  %s1 = inlined_call_operand.hbm [shape: bf16[20,128], index: 1, kind: input, shape index: {}]
  %s2 = inlined_call_operand.vmem [shape: f32[1,128], index: 2, kind: input, shape index: {}]
  %s3 = inlined_call_operand.hbm [shape: bf16[128,128], index: 3, kind: input, shape index: {}]
  %s4 = inlined_call_operand.vmem [shape: f32[1,128], index: 4, kind: input, shape index: {}]
  %s5 = inlined_call_operand.hbm [shape: bf16[128,128], index: 5, kind: input, shape index: {}]
  %s6 = inlined_call_operand.vmem [shape: f32[1,128], index: 6, kind: input, shape index: {}]
  %s7 = inlined_call_operand.hbm [shape: bf16[128,128], index: 7, kind: input, shape index: {}]
  %s8 = inlined_call_operand.vmem [shape: f32[1,128], index: 8, kind: input, shape index: {}]
  %s9 = inlined_call_operand.vmem [shape: f32[16,2], index: 9, kind: output, shape index: {}]
  %s10 = sld [smem:[#allocation0]]
  $region89: #{tpu_custom_call.1} parent=0
    _
  %s12 = ssub.s32 1, %s10
  %s13 = scalar_select 0, %s12, %s10
  $region1: #{tpu_custom_call.1} parent=0
    #allocation2 [shape = 'u8[8192]{0}', space=vmem, size = 0x2000, scoped, tag = 'input window, operand 0']
    #allocation3 [shape = 's32[2]{0}', space=sflag, size = 0x8, scoped, tag = 'scoped memory for tpu_custom_call.1']
    #allocation4 [shape = 'u8[6144]{0}', space=vmem, size = 0x1800, scoped, tag = 'input window, operand 1, single buffered']
    #allocation5 [shape = 's32[1]{0}', space=sflag, size = 0x4, scoped, tag = 'scoped memory for tpu_custom_call.1']
    #allocation6 [shape = 'u8[32768]{0}', space=vmem, size = 0x8000, scoped, tag = 'input window, operand 3, single buffered']
    #allocation7 [shape = 'u8[32768]{0}', space=vmem, size = 0x8000, scoped, tag = 'input window, operand 5, single buffered']
    #allocation8 [shape = 's32[1]{0}', space=sflag, size = 0x4, scoped, tag = 'scoped memory for tpu_custom_call.1']
    #allocation9 [shape = 'u8[32768]{0}', space=vmem, size = 0x8000, scoped, tag = 'input window, operand 7, single buffered']
    %14 = vsyncpa [#allocation3], 0
    %s15 = scalar_lea.sflag [#allocation3], 1
    %16 = vsyncpa %s15, 0
    %17 = vsyncpa [#allocation5], 0
    %18 = vsyncpa [#allocation8], 0
    loop: start=0, step=1, limit=4
    $region2: #{tpu_custom_call.1} parent=1 // loop_pre_header
      _
    $region3: #{tpu_custom_call.1} parent=1 // loop_header
      %s20 = sphi 0, %s24
      %p21 = scmp.ge.s32.totalorder %s20, 4
      %s30 = sphi 0, %s32
      %s33 = sphi 0, %s30
      %s34 = sphi 0, %s33
      %s50 = sphi 0, %s34
      %s54 = sphi 0, %s54
      %s56 = sphi 0, %s54
      %s57 = sphi 0, %s56
      %s71 = sphi 0, %s57
      %s75 = sphi 0, %s75
      %s77 = sphi 0, %s75
      %s78 = sphi 0, %s77
      %s92 = sphi 0, %s78
      %s96 = sphi 0, %s96
      %s98 = sphi 0, %s96
      %s99 = sphi 0, %s98
      %s113 = sphi 0, %s99
      %s117 = sphi 0, %s117
      %s119 = sphi 0, %s117
      %s120 = sphi 0, %s119
      %s134 = sphi 0, %s120
      %s138 = sphi 0, %s138
      %s140 = sphi 0, %s138
      %s141 = sphi 0, %s140
      %s155 = sphi 0, %s141
      %s159 = sphi 0, %s159
      %s161 = sphi 0, %s159
      %s162 = sphi 0, %s161
      %s176 = sphi 0, %s162
      %s180 = sphi 0, %s180
      %s182 = sphi 0, %s180
      %s183 = sphi 0, %s182
      %s197 = sphi 0, %s183
      %s201 = sphi 0, %s201
      %s203 = sphi 0, %s201
      %s204 = sphi 0, %s203
      %s218 = sphi 0, %s204
      %s224 = sphi 0, %s226
      %s227 = sphi 0, %s224
      %s228 = sphi 0, %s227
      %s244 = sphi 0, %s228
    $region4: #{tpu_custom_call.1} parent=1 // loop_header_branch
      %23 = sbr.rel (%p21) target = $region8
    $region5: #{tpu_custom_call.1} parent=1 // loop_body
      %s25 = ssub.s32 %s20, 1
      %s26 = ssub.s32 %s20, 2
      %s27 = sadd.s32 %s20, 1
      %s28 = ssub.s32 %s20, %s27
      %p29 = scmp.eq.s32.totalorder %s28, 0
      %s31 = sadd.s32 %s30, 1
      %s32 = scalar_select %p29, %s30, %s31
      %p35 = pneg %p29
      %p36 = scmp.eq.s32.totalorder %s20, 1
      %p37 = por %p35, %p36
      %p38 = scmp.ne.s32.totalorder %s30, %s33
      %p39 = scmp.eq.s32.totalorder %s20, 0
      %p40 = por %p38, %p39
      %p41 = scmp.ne.s32.totalorder %s30, %s33
      %p42 = scmp.eq.s32.totalorder %s25, 1
      %p43 = por %p41, %p42
      %p44 = scmp.ne.s32.totalorder %s33, %s34
      %p45 = scmp.eq.s32.totalorder %s25, 0
      %p46 = por %p44, %p45
      %p47 = scmp.ne.s32.totalorder %s33, %s34
      %p48 = scmp.eq.s32.totalorder %s26, 1
      %p49 = por %p47, %p48
      %p51 = scmp.ne.s32.totalorder %s34, %s50
      %p52 = scmp.eq.s32.totalorder %s26, 0
      %p53 = por %p51, %p52
      %s55 = sadd.s32 %s54, 1
      %p58 = scmp.eq.s32.totalorder %s20, 1
      %p59 = scmp.ne.s32.totalorder %s54, %s56
      %p60 = scmp.eq.s32.totalorder %s20, 0
      %p61 = por %p59, %p60
      %p62 = scmp.ne.s32.totalorder %s54, %s56
      %p63 = scmp.eq.s32.totalorder %s25, 1
      %p64 = por %p62, %p63
      %p65 = scmp.ne.s32.totalorder %s56, %s57
      %p66 = scmp.eq.s32.totalorder %s25, 0
      %p67 = por %p65, %p66
      %p68 = scmp.ne.s32.totalorder %s56, %s57
      %p69 = scmp.eq.s32.totalorder %s26, 1
      %p70 = por %p68, %p69
      %p72 = scmp.ne.s32.totalorder %s57, %s71
      %p73 = scmp.eq.s32.totalorder %s26, 0
      %p74 = por %p72, %p73
      %s76 = sadd.s32 %s75, 1
      %p79 = scmp.eq.s32.totalorder %s20, 1
      %p80 = scmp.ne.s32.totalorder %s75, %s77
      %p81 = scmp.eq.s32.totalorder %s20, 0
      %p82 = por %p80, %p81
      %p83 = scmp.ne.s32.totalorder %s75, %s77
      %p84 = scmp.eq.s32.totalorder %s25, 1
      %p85 = por %p83, %p84
      %p86 = scmp.ne.s32.totalorder %s77, %s78
      %p87 = scmp.eq.s32.totalorder %s25, 0
      %p88 = por %p86, %p87
      %p89 = scmp.ne.s32.totalorder %s77, %s78
      %p90 = scmp.eq.s32.totalorder %s26, 1
      %p91 = por %p89, %p90
      %p93 = scmp.ne.s32.totalorder %s78, %s92
      %p94 = scmp.eq.s32.totalorder %s26, 0
      %p95 = por %p93, %p94
      %s97 = sadd.s32 %s96, 1
      %p100 = scmp.eq.s32.totalorder %s20, 1
      %p101 = scmp.ne.s32.totalorder %s96, %s98
      %p102 = scmp.eq.s32.totalorder %s20, 0
      %p103 = por %p101, %p102
      %p104 = scmp.ne.s32.totalorder %s96, %s98
      %p105 = scmp.eq.s32.totalorder %s25, 1
      %p106 = por %p104, %p105
      %p107 = scmp.ne.s32.totalorder %s98, %s99
      %p108 = scmp.eq.s32.totalorder %s25, 0
      %p109 = por %p107, %p108
      %p110 = scmp.ne.s32.totalorder %s98, %s99
      %p111 = scmp.eq.s32.totalorder %s26, 1
      %p112 = por %p110, %p111
      %p114 = scmp.ne.s32.totalorder %s99, %s113
      %p115 = scmp.eq.s32.totalorder %s26, 0
      %p116 = por %p114, %p115
      %s118 = sadd.s32 %s117, 1
      %p121 = scmp.eq.s32.totalorder %s20, 1
      %p122 = scmp.ne.s32.totalorder %s117, %s119
      %p123 = scmp.eq.s32.totalorder %s20, 0
      %p124 = por %p122, %p123
      %p125 = scmp.ne.s32.totalorder %s117, %s119
      %p126 = scmp.eq.s32.totalorder %s25, 1
      %p127 = por %p125, %p126
      %p128 = scmp.ne.s32.totalorder %s119, %s120
      %p129 = scmp.eq.s32.totalorder %s25, 0
      %p130 = por %p128, %p129
      %p131 = scmp.ne.s32.totalorder %s119, %s120
      %p132 = scmp.eq.s32.totalorder %s26, 1
      %p133 = por %p131, %p132
      %p135 = scmp.ne.s32.totalorder %s120, %s134
      %p136 = scmp.eq.s32.totalorder %s26, 0
      %p137 = por %p135, %p136
      %s139 = sadd.s32 %s138, 1
      %p142 = scmp.eq.s32.totalorder %s20, 1
      %p143 = scmp.ne.s32.totalorder %s138, %s140
      %p144 = scmp.eq.s32.totalorder %s20, 0
      %p145 = por %p143, %p144
      %p146 = scmp.ne.s32.totalorder %s138, %s140
      %p147 = scmp.eq.s32.totalorder %s25, 1
      %p148 = por %p146, %p147
      %p149 = scmp.ne.s32.totalorder %s140, %s141
      %p150 = scmp.eq.s32.totalorder %s25, 0
      %p151 = por %p149, %p150
      %p152 = scmp.ne.s32.totalorder %s140, %s141
      %p153 = scmp.eq.s32.totalorder %s26, 1
      %p154 = por %p152, %p153
      %p156 = scmp.ne.s32.totalorder %s141, %s155
      %p157 = scmp.eq.s32.totalorder %s26, 0
      %p158 = por %p156, %p157
      %s160 = sadd.s32 %s159, 1
      %p163 = scmp.eq.s32.totalorder %s20, 1
      %p164 = scmp.ne.s32.totalorder %s159, %s161
      %p165 = scmp.eq.s32.totalorder %s20, 0
      %p166 = por %p164, %p165
      %p167 = scmp.ne.s32.totalorder %s159, %s161
      %p168 = scmp.eq.s32.totalorder %s25, 1
      %p169 = por %p167, %p168
      %p170 = scmp.ne.s32.totalorder %s161, %s162
      %p171 = scmp.eq.s32.totalorder %s25, 0
      %p172 = por %p170, %p171
      %p173 = scmp.ne.s32.totalorder %s161, %s162
      %p174 = scmp.eq.s32.totalorder %s26, 1
      %p175 = por %p173, %p174
      %p177 = scmp.ne.s32.totalorder %s162, %s176
      %p178 = scmp.eq.s32.totalorder %s26, 0
      %p179 = por %p177, %p178
      %s181 = sadd.s32 %s180, 1
      %p184 = scmp.eq.s32.totalorder %s20, 1
      %p185 = scmp.ne.s32.totalorder %s180, %s182
      %p186 = scmp.eq.s32.totalorder %s20, 0
      %p187 = por %p185, %p186
      %p188 = scmp.ne.s32.totalorder %s180, %s182
      %p189 = scmp.eq.s32.totalorder %s25, 1
      %p190 = por %p188, %p189
      %p191 = scmp.ne.s32.totalorder %s182, %s183
      %p192 = scmp.eq.s32.totalorder %s25, 0
      %p193 = por %p191, %p192
      %p194 = scmp.ne.s32.totalorder %s182, %s183
      %p195 = scmp.eq.s32.totalorder %s26, 1
      %p196 = por %p194, %p195
      %p198 = scmp.ne.s32.totalorder %s183, %s197
      %p199 = scmp.eq.s32.totalorder %s26, 0
      %p200 = por %p198, %p199
      %s202 = sadd.s32 %s201, 1
      %p205 = scmp.eq.s32.totalorder %s20, 1
      %p206 = scmp.ne.s32.totalorder %s201, %s203
      %p207 = scmp.eq.s32.totalorder %s20, 0
      %p208 = por %p206, %p207
      %p209 = scmp.ne.s32.totalorder %s201, %s203
      %p210 = scmp.eq.s32.totalorder %s25, 1
      %p211 = por %p209, %p210
      %p212 = scmp.ne.s32.totalorder %s203, %s204
      %p213 = scmp.eq.s32.totalorder %s25, 0
      %p214 = por %p212, %p213
      %p215 = scmp.ne.s32.totalorder %s203, %s204
      %p216 = scmp.eq.s32.totalorder %s26, 1
      %p217 = por %p215, %p216
      %p219 = scmp.ne.s32.totalorder %s204, %s218
      %p220 = scmp.eq.s32.totalorder %s26, 0
      %p221 = por %p219, %p220
      %s222 = ssub.s32 %s20, %s27
      %p223 = scmp.eq.s32.totalorder %s222, 0
      %s225 = sadd.s32 %s224, 1
      %s226 = scalar_select %p223, %s224, %s225
      %p229 = pneg %p223
      %p230 = scmp.eq.s32.totalorder %s20, 1
      %p231 = por %p229, %p230
      %p232 = scmp.ne.s32.totalorder %s224, %s227
      %p233 = scmp.eq.s32.totalorder %s20, 0
      %p234 = por %p232, %p233
      %p235 = scmp.ne.s32.totalorder %s224, %s227
      %p236 = scmp.eq.s32.totalorder %s25, 1
      %p237 = por %p235, %p236
      %p238 = scmp.ne.s32.totalorder %s227, %s228
      %p239 = scmp.eq.s32.totalorder %s25, 0
      %p240 = por %p238, %p239
      %p241 = scmp.ne.s32.totalorder %s227, %s228
      %p242 = scmp.eq.s32.totalorder %s26, 1
      %p243 = por %p241, %p242
      %p245 = scmp.ne.s32.totalorder %s228, %s244
      %p246 = scmp.eq.s32.totalorder %s26, 0
      %p247 = por %p245, %p246
      %p248 = scmp.le.s32.totalorder 1, %s20
      %p249 = scmp.lt.s32.totalorder %s20, 3
      %p250 = pnand %p248, %p249
      %p251 = pneg %p250
      // Predicated region
      $region9: #{tpu_custom_call.1} parent=5 // pred_check
        _
      $region10: #{tpu_custom_call.1} parent=5 // pred_check_branch
        %253 = sbr.rel (%p250) target = $region12
      $region11: #{tpu_custom_call.1} parent=5 // pred_region
        %s254 = ssub.s32 %s20, 1
        // Predicated region
        $region13: #{tpu_custom_call.1} parent=11 // pred_check
          %p255 = pneg %p67
        $region14: #{tpu_custom_call.1} parent=11 // pred_check_branch
          %257 = sbr.rel (%p255) target = $region16
        $region15: #{tpu_custom_call.1} parent=11 // pred_region
          %s259 = ssub.s32 192, 192
          %260 = vsyncadd [#allocation5], %s259
          %s261 = sshll.u32 [#allocation4], 4
          %s262 = int_to_ptr.vmem [resolvable:$true] %s261
          %267 = dma.hbm_to_vmem [thread:$0]  %s1, 192, %s262, [#allocation5], 64, 64, 4
        $region16: #{tpu_custom_call.1} parent=11 // pred_fallthru
          _
        // Predicated region
        $region17: #{tpu_custom_call.1} parent=11 // pred_check
          %p268 = pneg %p88
        $region18: #{tpu_custom_call.1} parent=11 // pred_check_branch
          %270 = sbr.rel (%p268) target = $region20
        $region19: #{tpu_custom_call.1} parent=11 // pred_region
          _
        $region20: #{tpu_custom_call.1} parent=11 // pred_fallthru
          _
        // Predicated region
        $region21: #{tpu_custom_call.1} parent=11 // pred_check
          %p271 = pneg %p109
        $region22: #{tpu_custom_call.1} parent=11 // pred_check_branch
          %273 = sbr.rel (%p271) target = $region24
        $region23: #{tpu_custom_call.1} parent=11 // pred_region
          %s275 = ssub.s32 1024, 1024
          %276 = vsyncadd [#allocation5], %s275
          %s277 = sshll.u32 [#allocation6], 4
          %s278 = int_to_ptr.vmem [resolvable:$true] %s277
          %283 = dma.hbm_to_vmem [thread:$0]  %s3, 1024, %s278, [#allocation5], 64, 64, 4
        $region24: #{tpu_custom_call.1} parent=11 // pred_fallthru
          _
        // Predicated region
        $region25: #{tpu_custom_call.1} parent=11 // pred_check
          %p284 = pneg %p130
        $region26: #{tpu_custom_call.1} parent=11 // pred_check_branch
          %286 = sbr.rel (%p284) target = $region28
        $region27: #{tpu_custom_call.1} parent=11 // pred_region
          _
        $region28: #{tpu_custom_call.1} parent=11 // pred_fallthru
          _
        // Predicated region
        $region29: #{tpu_custom_call.1} parent=11 // pred_check
          %p287 = pneg %p151
        $region30: #{tpu_custom_call.1} parent=11 // pred_check_branch
          %289 = sbr.rel (%p287) target = $region32
        $region31: #{tpu_custom_call.1} parent=11 // pred_region
          %s291 = ssub.s32 1024, 1024
          %292 = vsyncadd [#allocation8], %s291
          %s293 = sshll.u32 [#allocation7], 4
          %s294 = int_to_ptr.vmem [resolvable:$true] %s293
          %299 = dma.hbm_to_vmem [thread:$0]  %s5, 1024, %s294, [#allocation8], 64, 64, 4
        $region32: #{tpu_custom_call.1} parent=11 // pred_fallthru
          _
        // Predicated region
        $region33: #{tpu_custom_call.1} parent=11 // pred_check
          %p300 = pneg %p172
        $region34: #{tpu_custom_call.1} parent=11 // pred_check_branch
          %302 = sbr.rel (%p300) target = $region36
        $region35: #{tpu_custom_call.1} parent=11 // pred_region
          _
        $region36: #{tpu_custom_call.1} parent=11 // pred_fallthru
          _
        // Predicated region
        $region37: #{tpu_custom_call.1} parent=11 // pred_check
          %p303 = pneg %p193
        $region38: #{tpu_custom_call.1} parent=11 // pred_check_branch
          %305 = sbr.rel (%p303) target = $region40
        $region39: #{tpu_custom_call.1} parent=11 // pred_region
          %s307 = ssub.s32 1024, 1024
          %308 = vsyncadd [#allocation8], %s307
          %s309 = sshll.u32 [#allocation9], 4
          %s310 = int_to_ptr.vmem [resolvable:$true] %s309
          %315 = dma.hbm_to_vmem [thread:$0]  %s7, 1024, %s310, [#allocation8], 64, 64, 4
        $region40: #{tpu_custom_call.1} parent=11 // pred_fallthru
          _
        // Predicated region
        $region41: #{tpu_custom_call.1} parent=11 // pred_check
          %p316 = pneg %p214
        $region42: #{tpu_custom_call.1} parent=11 // pred_check_branch
          %318 = sbr.rel (%p316) target = $region44
        $region43: #{tpu_custom_call.1} parent=11 // pred_region
          _
        $region44: #{tpu_custom_call.1} parent=11 // pred_fallthru
          _
      $region12: #{tpu_custom_call.1} parent=5 // pred_fallthru
        _
      %p319 = scmp.lt.s32.totalorder %s20, 2
      // Predicated region
      $region45: #{tpu_custom_call.1} parent=5 // pred_check
        %p320 = pneg %p319
      $region46: #{tpu_custom_call.1} parent=5 // pred_check_branch
        %322 = sbr.rel (%p320) target = $region48
      $region47: #{tpu_custom_call.1} parent=5 // pred_region
        // Predicated region
        $region49: #{tpu_custom_call.1} parent=47 // pred_check
          %p323 = pneg %p40
        $region50: #{tpu_custom_call.1} parent=47 // pred_check_branch
          %325 = sbr.rel (%p323) target = $region52
        $region51: #{tpu_custom_call.1} parent=47 // pred_region
          %s326 = sand.u32 %s30, 1
          %s327 = scalar_lea.sflag [#allocation3], %s326
          %s328 = sand.u32 %s30, 1
          %s329 = smul.addr %s328, 8
          %s330 = scalar_lea.vmem [#allocation2], %s329
          %s332 = ssub.s32 128, 128
          %333 = vsyncadd %s327, %s332
          %s334 = smul.addr %s20, 128
          %s335 = scalar_lea.hbm %s0, %s334
          %s337 = sshll.u32 %s330, 4
          %s338 = int_to_ptr.vmem [resolvable:$true] %s337
          %340 = dma.hbm_to_vmem [thread:$0]  %s335, 128, %s338, %s327
        $region52: #{tpu_custom_call.1} parent=47 // pred_fallthru
          _
      $region48: #{tpu_custom_call.1} parent=5 // pred_fallthru
        _
      %p341 = scmp.le.s32.totalorder 1, %s20
      %p342 = scmp.lt.s32.totalorder %s20, 3
      %p343 = pnand %p341, %p342
      %p344 = pneg %p343
      // Predicated region
      $region53: #{tpu_custom_call.1} parent=5 // pred_check
        _
      $region54: #{tpu_custom_call.1} parent=5 // pred_check_branch
        %346 = sbr.rel (%p343) target = $region56
      $region55: #{tpu_custom_call.1} parent=5 // pred_region
        %s347 = ssub.s32 %s20, 1
        %s348 = sand.u32 %s33, 1
        %s349 = scalar_lea.sflag [#allocation3], %s348
        %s350 = sand.u32 %s33, 1
        %s351 = smul.addr %s350, 8
        %s352 = scalar_lea.vmem [#allocation2], %s351
        // Predicated region
        $region57: #{tpu_custom_call.1} parent=55 // pred_check
          %p353 = pneg %p46
        $region58: #{tpu_custom_call.1} parent=55 // pred_check_branch
          %355 = sbr.rel (%p353) target = $region60
        $region59: #{tpu_custom_call.1} parent=55 // pred_region
          %356 = dma.done %s349, 128
        $region60: #{tpu_custom_call.1} parent=55 // pred_fallthru
          _
        // Predicated region
        $region61: #{tpu_custom_call.1} parent=55 // pred_check
          %p357 = pneg %p67
        $region62: #{tpu_custom_call.1} parent=55 // pred_check_branch
          %359 = sbr.rel (%p357) target = $region64
        $region63: #{tpu_custom_call.1} parent=55 // pred_region
          %360 = dma.done [#allocation5], 192
        $region64: #{tpu_custom_call.1} parent=55 // pred_fallthru
          _
        // Predicated region
        $region65: #{tpu_custom_call.1} parent=55 // pred_check
          %p361 = pneg %p109
        $region66: #{tpu_custom_call.1} parent=55 // pred_check_branch
          %363 = sbr.rel (%p361) target = $region68
        $region67: #{tpu_custom_call.1} parent=55 // pred_region
          %364 = dma.done [#allocation5], 1024
        $region68: #{tpu_custom_call.1} parent=55 // pred_fallthru
          _
        // Predicated region
        $region69: #{tpu_custom_call.1} parent=55 // pred_check
          %p365 = pneg %p151
        $region70: #{tpu_custom_call.1} parent=55 // pred_check_branch
          %367 = sbr.rel (%p365) target = $region72
        $region71: #{tpu_custom_call.1} parent=55 // pred_region
          %368 = dma.done [#allocation8], 1024
        $region72: #{tpu_custom_call.1} parent=55 // pred_fallthru
          _
        // Predicated region
        $region73: #{tpu_custom_call.1} parent=55 // pred_check
          %p369 = pneg %p193
        $region74: #{tpu_custom_call.1} parent=55 // pred_check_branch
          %371 = sbr.rel (%p369) target = $region76
        $region75: #{tpu_custom_call.1} parent=55 // pred_region
          %372 = dma.done [#allocation8], 1024
        $region76: #{tpu_custom_call.1} parent=55 // pred_fallthru
          _
        %s373 = sand.u32 %s33, 1
        %s374 = scalar_lea.sflag [#allocation3], %s373
        %s375 = sand.u32 %s33, 1
        %s376 = smul.addr %s375, 8
        %s377 = scalar_lea.vmem [#allocation2], %s376
        %p378 = pneg %p46
        %p379 = pneg %p43
        %p380 = pneg %p67
        %p381 = pneg %p64
        %p382 = pneg %p88
        %p383 = pneg %p85
        %p384 = pneg %p109
        %p385 = pneg %p106
        %p386 = pneg %p130
        %p387 = pneg %p127
        %p388 = pneg %p151
        %p389 = pneg %p148
        %p390 = pneg %p172
        %p391 = pneg %p169
        %p392 = pneg %p193
        %p393 = pneg %p190
        %p394 = pneg %p214
        %p395 = pneg %p211
        %p396 = pneg %p240
        %p397 = pneg %p237
        %p398 = scmp.lt.s32.totalorder %s25, 1
        %s399 = scalar_select %p398, %s25, 1
        %s400 = smul.addr %s399, 8
        %s401 = scalar_lea.vmem %s9, %s400
        %p402 = scmp.lt.s32.totalorder %s25, 1
        %s403 = scalar_select %p402, %s25, 1
        %s404 = smul.addr %s403, 8
        %s405 = scalar_lea.vmem %s9, %s404
        %v407 = vld [vmem:[%s352] sm:$0xff]
        %v408 = vpack.c.bf16 %v407, %v407
        %v409 = vld [vmem:[#allocation4] sm:$0xf]
        %v410 = vld [vmem:[#allocation4 + $0x4] sm:$0xf]
        %v411 = vld [vmem:[#allocation4 + $0x8] sm:$0x3]
        %v412 = vld [vmem:[%s2] sm:$0x1]
        %v414 = vlaneseq
        %v415 = vshrl.u32 %v414, 7
        %v416 = vsub.s32 0, %v415
        %v417 = vrot.slane %v412, %v416
        %v422 = vunpack.c.l.b16 %v409
        %v423 = vunpack.c.l.b16 %v410
        %v424 = vunpack.c.l.b16 %v411
        %v425 = vpack.c.b16 %v423, %v422
        %v426 = vpack.c.b16 %v424, %v424
        %vm428 = vcmask 162816
        %v430 = vsel %vm428, %v408, 0
        %vm432 = vcmask 1041408
        %v434 = vsel %vm432, %v426, 0
        %436 = vmatprep.subr.bf16.mxu0 0
        %437 = vmatpush1.bf16.msra.mxu0 %v425
        %438 = vmatprep.subr.bf16.mxu0 0
        %439 = vmatpush1.bf16.msra.mxu0 %v434
        %440 = vmatprep.subr.bf16.mxu0 0
        %441 = vmatpush1.bf16.msra.mxu0 0
        %442 = vmatprep.subr.bf16.mxu0 0
        %443 = vmatpush1.bf16.msra.mxu0 0
        %444 = vmatprep.subr.bf16.mxu0 0
        %445 = vmatpush1.bf16.msra.mxu0 0
        %446 = vmatprep.subr.bf16.mxu0 0
        %447 = vmatpush1.bf16.msra.mxu0 0
        %448 = vmatprep.subr.bf16.mxu0 0
        %449 = vmatpush1.bf16.msra.mxu0 0
        %450 = vmatprep.subr.bf16.mxu0 0
        %451 = vmatpush1.bf16.msra.mxu0 0
        %452 = vmatprep.subr.bf16.mxu0 0
        %453 = vmatpush1.bf16.msra.mxu0 0
        %454 = vmatprep.subr.bf16.mxu0 0
        %455 = vmatpush1.bf16.msra.mxu0 0
        %456 = vmatprep.subr.bf16.mxu0 0
        %457 = vmatpush1.bf16.msra.mxu0 0
        %458 = vmatprep.subr.bf16.mxu0 0
        %459 = vmatpush1.bf16.msra.mxu0 0
        %460 = vmatprep.subr.bf16.mxu0 0
        %461 = vmatpush1.bf16.msra.mxu0 0
        %462 = vmatprep.subr.bf16.mxu0 0
        %463 = vmatpush1.bf16.msra.mxu0 0
        %464 = vmatprep.subr.bf16.mxu0 0
        %465 = vmatpush1.bf16.msra.mxu0 0
        %466 = vmatprep.subr.bf16.mxu0 0
        %467 = vmatpush1.bf16.msra.mxu0 0
        %468 = vmatprep.mubr.bf16.mxu0 0
        %469 = vmatmul.mubr.bf16.gmra.mrb[0].mxu0 %v430
        %v470 = vpop.f32.mrb[0].mxu0
        %v471 = vadd.f32 %v417, %v470
        %v472 = vpop.f32.mrb[0].mxu0
        %v473 = vpop.f32.mrb[0].mxu0
        %v474 = vpop.f32.mrb[0].mxu0
        %475 = vdwg.mxu0
        %v476 = vmax.f32 %v471, 0.0
        %v477 = vpack.c.bf16 %v476, %v476
        %v478 = vld [vmem:[#allocation6] sm:$0xf]
        %v479 = vld [vmem:[#allocation6 + $0x4] sm:$0xf]
        %v480 = vld [vmem:[#allocation6 + $0x8] sm:$0xf]
        %v481 = vld [vmem:[#allocation6 + $0xc] sm:$0xf]
        %v482 = vld [vmem:[#allocation6 + $0x10] sm:$0xf]
        %v483 = vld [vmem:[#allocation6 + $0x14] sm:$0xf]
        %v484 = vld [vmem:[#allocation6 + $0x18] sm:$0xf]
        %v485 = vld [vmem:[#allocation6 + $0x1c] sm:$0xf]
        %v486 = vld [vmem:[#allocation6 + $0x20] sm:$0xf]
        %v487 = vld [vmem:[#allocation6 + $0x24] sm:$0xf]
        %v488 = vld [vmem:[#allocation6 + $0x28] sm:$0xf]
        %v489 = vld [vmem:[#allocation6 + $0x2c] sm:$0xf]
        %v490 = vld [vmem:[#allocation6 + $0x30] sm:$0xf]
        %v491 = vld [vmem:[#allocation6 + $0x34] sm:$0xf]
        %v492 = vld [vmem:[#allocation6 + $0x38] sm:$0xf]
        %v493 = vld [vmem:[#allocation6 + $0x3c] sm:$0xf]
        %v494 = vld [vmem:[%s4] sm:$0x1]
        %v496 = vlaneseq
        %v497 = vshrl.u32 %v496, 7
        %v498 = vsub.s32 0, %v497
        %v499 = vrot.slane %v494, %v498
        %v517 = vunpack.c.l.b16 %v478
        %v518 = vunpack.c.l.b16 %v479
        %v519 = vunpack.c.l.b16 %v480
        %v520 = vunpack.c.l.b16 %v481
        %v521 = vunpack.c.l.b16 %v482
        %v522 = vunpack.c.l.b16 %v483
        %v523 = vunpack.c.l.b16 %v484
        %v524 = vunpack.c.l.b16 %v485
        %v525 = vunpack.c.l.b16 %v486
        %v526 = vunpack.c.l.b16 %v487
        %v527 = vunpack.c.l.b16 %v488
        %v528 = vunpack.c.l.b16 %v489
        %v529 = vunpack.c.l.b16 %v490
        %v530 = vunpack.c.l.b16 %v491
        %v531 = vunpack.c.l.b16 %v492
        %v532 = vunpack.c.l.b16 %v493
        %v533 = vpack.c.b16 %v518, %v517
        %v534 = vpack.c.b16 %v520, %v519
        %v535 = vpack.c.b16 %v522, %v521
        %v536 = vpack.c.b16 %v524, %v523
        %v537 = vpack.c.b16 %v526, %v525
        %v538 = vpack.c.b16 %v528, %v527
        %v539 = vpack.c.b16 %v530, %v529
        %v540 = vpack.c.b16 %v532, %v531
        %549 = vmatprep.subr.bf16.mxu0 0
        %550 = vmatpush1.bf16.msra.mxu0 %v533
        %551 = vmatprep.subr.bf16.mxu0 0
        %552 = vmatpush1.bf16.msra.mxu0 %v534
        %553 = vmatprep.subr.bf16.mxu0 0
        %554 = vmatpush1.bf16.msra.mxu0 %v535
        %555 = vmatprep.subr.bf16.mxu0 0
        %556 = vmatpush1.bf16.msra.mxu0 %v536
        %557 = vmatprep.subr.bf16.mxu0 0
        %558 = vmatpush1.bf16.msra.mxu0 %v537
        %559 = vmatprep.subr.bf16.mxu0 0
        %560 = vmatpush1.bf16.msra.mxu0 %v538
        %561 = vmatprep.subr.bf16.mxu0 0
        %562 = vmatpush1.bf16.msra.mxu0 %v539
        %563 = vmatprep.subr.bf16.mxu0 0
        %564 = vmatpush1.bf16.msra.mxu0 %v540
        %565 = vmatprep.subr.bf16.mxu0 0
        %566 = vmatpush1.bf16.msra.mxu0 0
        %567 = vmatprep.subr.bf16.mxu0 0
        %568 = vmatpush1.bf16.msra.mxu0 0
        %569 = vmatprep.subr.bf16.mxu0 0
        %570 = vmatpush1.bf16.msra.mxu0 0
        %571 = vmatprep.subr.bf16.mxu0 0
        %572 = vmatpush1.bf16.msra.mxu0 0
        %573 = vmatprep.subr.bf16.mxu0 0
        %574 = vmatpush1.bf16.msra.mxu0 0
        %575 = vmatprep.subr.bf16.mxu0 0
        %576 = vmatpush1.bf16.msra.mxu0 0
        %577 = vmatprep.subr.bf16.mxu0 0
        %578 = vmatpush1.bf16.msra.mxu0 0
        %579 = vmatprep.subr.bf16.mxu0 0
        %580 = vmatpush1.bf16.msra.mxu0 0
        %581 = vmatprep.mubr.bf16.mxu0 0
        %582 = vmatmul.mubr.bf16.gmra.mrb[0].mxu0 %v477
        %v583 = vpop.f32.mrb[0].mxu0
        %v584 = vadd.f32 %v499, %v583
        %v585 = vpop.f32.mrb[0].mxu0
        %v586 = vpop.f32.mrb[0].mxu0
        %v587 = vpop.f32.mrb[0].mxu0
        %588 = vdwg.mxu0
        %vm589 = vcmp.gt.f32.partialorder %v584, 0.0
        %v590 = vmul.f32 %v584, 0.01
        %v591 = vsel %vm589, %v584, %v590
        %v592 = vpack.c.bf16 %v591, %v591
        %v593 = vld [vmem:[#allocation7] sm:$0xf]
        %v594 = vld [vmem:[#allocation7 + $0x4] sm:$0xf]
        %v595 = vld [vmem:[#allocation7 + $0x8] sm:$0xf]
        %v596 = vld [vmem:[#allocation7 + $0xc] sm:$0xf]
        %v597 = vld [vmem:[#allocation7 + $0x10] sm:$0xf]
        %v598 = vld [vmem:[#allocation7 + $0x14] sm:$0xf]
        %v599 = vld [vmem:[#allocation7 + $0x18] sm:$0xf]
        %v600 = vld [vmem:[#allocation7 + $0x1c] sm:$0xf]
        %v601 = vld [vmem:[#allocation7 + $0x20] sm:$0xf]
        %v602 = vld [vmem:[#allocation7 + $0x24] sm:$0xf]
        %v603 = vld [vmem:[#allocation7 + $0x28] sm:$0xf]
        %v604 = vld [vmem:[#allocation7 + $0x2c] sm:$0xf]
        %v605 = vld [vmem:[#allocation7 + $0x30] sm:$0xf]
        %v606 = vld [vmem:[#allocation7 + $0x34] sm:$0xf]
        %v607 = vld [vmem:[#allocation7 + $0x38] sm:$0xf]
        %v608 = vld [vmem:[#allocation7 + $0x3c] sm:$0xf]
        %v609 = vld [vmem:[%s6] sm:$0x1]
        %v611 = vlaneseq
        %v612 = vshrl.u32 %v611, 7
        %v613 = vsub.s32 0, %v612
        %v614 = vrot.slane %v609, %v613
        %v632 = vunpack.c.l.b16 %v593
        %v633 = vunpack.c.l.b16 %v594
        %v634 = vunpack.c.l.b16 %v595
        %v635 = vunpack.c.l.b16 %v596
        %v636 = vunpack.c.l.b16 %v597
        %v637 = vunpack.c.l.b16 %v598
        %v638 = vunpack.c.l.b16 %v599
        %v639 = vunpack.c.l.b16 %v600
        %v640 = vunpack.c.l.b16 %v601
        %v641 = vunpack.c.l.b16 %v602
        %v642 = vunpack.c.l.b16 %v603
        %v643 = vunpack.c.l.b16 %v604
        %v644 = vunpack.c.l.b16 %v605
        %v645 = vunpack.c.l.b16 %v606
        %v646 = vunpack.c.l.b16 %v607
        %v647 = vunpack.c.l.b16 %v608
        %v648 = vpack.c.b16 %v633, %v632
        %v649 = vpack.c.b16 %v635, %v634
        %v650 = vpack.c.b16 %v637, %v636
        %v651 = vpack.c.b16 %v639, %v638
        %v652 = vpack.c.b16 %v641, %v640
        %v653 = vpack.c.b16 %v643, %v642
        %v654 = vpack.c.b16 %v645, %v644
        %v655 = vpack.c.b16 %v647, %v646
        %664 = vmatprep.subr.bf16.mxu0 0
        %665 = vmatpush1.bf16.msra.mxu0 %v648
        %666 = vmatprep.subr.bf16.mxu0 0
        %667 = vmatpush1.bf16.msra.mxu0 %v649
        %668 = vmatprep.subr.bf16.mxu0 0
        %669 = vmatpush1.bf16.msra.mxu0 %v650
        %670 = vmatprep.subr.bf16.mxu0 0
        %671 = vmatpush1.bf16.msra.mxu0 %v651
        %672 = vmatprep.subr.bf16.mxu0 0
        %673 = vmatpush1.bf16.msra.mxu0 %v652
        %674 = vmatprep.subr.bf16.mxu0 0
        %675 = vmatpush1.bf16.msra.mxu0 %v653
        %676 = vmatprep.subr.bf16.mxu0 0
        %677 = vmatpush1.bf16.msra.mxu0 %v654
        %678 = vmatprep.subr.bf16.mxu0 0
        %679 = vmatpush1.bf16.msra.mxu0 %v655
        %680 = vmatprep.subr.bf16.mxu0 0
        %681 = vmatpush1.bf16.msra.mxu0 0
        %682 = vmatprep.subr.bf16.mxu0 0
        %683 = vmatpush1.bf16.msra.mxu0 0
        %684 = vmatprep.subr.bf16.mxu0 0
        %685 = vmatpush1.bf16.msra.mxu0 0
        %686 = vmatprep.subr.bf16.mxu0 0
        %687 = vmatpush1.bf16.msra.mxu0 0
        %688 = vmatprep.subr.bf16.mxu0 0
        %689 = vmatpush1.bf16.msra.mxu0 0
        %690 = vmatprep.subr.bf16.mxu0 0
        %691 = vmatpush1.bf16.msra.mxu0 0
        %692 = vmatprep.subr.bf16.mxu0 0
        %693 = vmatpush1.bf16.msra.mxu0 0
        %694 = vmatprep.subr.bf16.mxu0 0
        %695 = vmatpush1.bf16.msra.mxu0 0
        %696 = vmatprep.mubr.bf16.mxu0 0
        %697 = vmatmul.mubr.bf16.gmra.mrb[0].mxu0 %v592
        %v698 = vpop.f32.mrb[0].mxu0
        %v699 = vadd.f32 %v614, %v698
        %v700 = vpop.f32.mrb[0].mxu0
        %v701 = vpop.f32.mrb[0].mxu0
        %v702 = vpop.f32.mrb[0].mxu0
        %703 = vdwg.mxu0
        %vm704 = vcmp.gt.f32.partialorder %v699, 0.0
        %v705 = vmul.f32 %v699, 0.01
        %v706 = vsel %vm704, %v699, %v705
        %v707 = vpack.c.bf16 %v706, %v706
        %v708 = vld [vmem:[#allocation9] sm:$0xf]
        %v709 = vld [vmem:[#allocation9 + $0x4] sm:$0xf]
        %v710 = vld [vmem:[#allocation9 + $0x8] sm:$0xf]
        %v711 = vld [vmem:[#allocation9 + $0xc] sm:$0xf]
        %v712 = vld [vmem:[#allocation9 + $0x10] sm:$0xf]
        %v713 = vld [vmem:[#allocation9 + $0x14] sm:$0xf]
        %v714 = vld [vmem:[#allocation9 + $0x18] sm:$0xf]
        %v715 = vld [vmem:[#allocation9 + $0x1c] sm:$0xf]
        %v716 = vld [vmem:[#allocation9 + $0x20] sm:$0xf]
        %v717 = vld [vmem:[#allocation9 + $0x24] sm:$0xf]
        %v718 = vld [vmem:[#allocation9 + $0x28] sm:$0xf]
        %v719 = vld [vmem:[#allocation9 + $0x2c] sm:$0xf]
        %v720 = vld [vmem:[#allocation9 + $0x30] sm:$0xf]
        %v721 = vld [vmem:[#allocation9 + $0x34] sm:$0xf]
        %v722 = vld [vmem:[#allocation9 + $0x38] sm:$0xf]
        %v723 = vld [vmem:[#allocation9 + $0x3c] sm:$0xf]
        %v724 = vld [vmem:[%s8] sm:$0x1]
        %v726 = vlaneseq
        %v727 = vshrl.u32 %v726, 7
        %v728 = vsub.s32 0, %v727
        %v729 = vrot.slane %v724, %v728
        %v747 = vunpack.c.l.b16 %v708
        %v748 = vunpack.c.l.b16 %v709
        %v749 = vunpack.c.l.b16 %v710
        %v750 = vunpack.c.l.b16 %v711
        %v751 = vunpack.c.l.b16 %v712
        %v752 = vunpack.c.l.b16 %v713
        %v753 = vunpack.c.l.b16 %v714
        %v754 = vunpack.c.l.b16 %v715
        %v755 = vunpack.c.l.b16 %v716
        %v756 = vunpack.c.l.b16 %v717
        %v757 = vunpack.c.l.b16 %v718
        %v758 = vunpack.c.l.b16 %v719
        %v759 = vunpack.c.l.b16 %v720
        %v760 = vunpack.c.l.b16 %v721
        %v761 = vunpack.c.l.b16 %v722
        %v762 = vunpack.c.l.b16 %v723
        %v763 = vpack.c.b16 %v748, %v747
        %v764 = vpack.c.b16 %v750, %v749
        %v765 = vpack.c.b16 %v752, %v751
        %v766 = vpack.c.b16 %v754, %v753
        %v767 = vpack.c.b16 %v756, %v755
        %v768 = vpack.c.b16 %v758, %v757
        %v769 = vpack.c.b16 %v760, %v759
        %v770 = vpack.c.b16 %v762, %v761
        %779 = vmatprep.subr.bf16.mxu0 0
        %780 = vmatpush1.bf16.msra.mxu0 %v763
        %781 = vmatprep.subr.bf16.mxu0 0
        %782 = vmatpush1.bf16.msra.mxu0 %v764
        %783 = vmatprep.subr.bf16.mxu0 0
        %784 = vmatpush1.bf16.msra.mxu0 %v765
        %785 = vmatprep.subr.bf16.mxu0 0
        %786 = vmatpush1.bf16.msra.mxu0 %v766
        %787 = vmatprep.subr.bf16.mxu0 0
        %788 = vmatpush1.bf16.msra.mxu0 %v767
        %789 = vmatprep.subr.bf16.mxu0 0
        %790 = vmatpush1.bf16.msra.mxu0 %v768
        %791 = vmatprep.subr.bf16.mxu0 0
        %792 = vmatpush1.bf16.msra.mxu0 %v769
        %793 = vmatprep.subr.bf16.mxu0 0
        %794 = vmatpush1.bf16.msra.mxu0 %v770
        %795 = vmatprep.subr.bf16.mxu0 0
        %796 = vmatpush1.bf16.msra.mxu0 0
        %797 = vmatprep.subr.bf16.mxu0 0
        %798 = vmatpush1.bf16.msra.mxu0 0
        %799 = vmatprep.subr.bf16.mxu0 0
        %800 = vmatpush1.bf16.msra.mxu0 0
        %801 = vmatprep.subr.bf16.mxu0 0
        %802 = vmatpush1.bf16.msra.mxu0 0
        %803 = vmatprep.subr.bf16.mxu0 0
        %804 = vmatpush1.bf16.msra.mxu0 0
        %805 = vmatprep.subr.bf16.mxu0 0
        %806 = vmatpush1.bf16.msra.mxu0 0
        %807 = vmatprep.subr.bf16.mxu0 0
        %808 = vmatpush1.bf16.msra.mxu0 0
        %809 = vmatprep.subr.bf16.mxu0 0
        %810 = vmatpush1.bf16.msra.mxu0 0
        %811 = vmatprep.mubr.bf16.mxu0 0
        %812 = vmatmul.mubr.bf16.gmra.mrb[0].mxu0 %v707
        %v813 = vpop.f32.mrb[0].mxu0
        %v814 = vadd.f32 %v729, %v813
        %v815 = vpop.f32.mrb[0].mxu0
        %v816 = vpop.f32.mrb[0].mxu0
        %v817 = vpop.f32.mrb[0].mxu0
        %818 = vdwg.mxu0
        %v819 = vsub.f32 0.0, %v814
        %v820 = vmul.f32 %v819, 1.442695
        %v821 = vpow.pop %v820
        %v822 = vadd.f32 %v821, 1.0
        %v823 = vrcp.pop %v822
        %v824 = vmul.f32 1.0, %v823
        %v825 = vlaneseq
        %v826 = vand.u32 %v825, 127
        %vm827 = vcmp.eq.s32.totalorder %v826, 1
        %v828 = vsub.f32 1.0, %v824
        %v829 = vsel %vm827, %v824, %v828
        %vm830 = vcmask 15360
        %831 = vst.msk [vmem:[%s405] sm:$0xff] %vm830, %v829
        %p832 = scmp.lt.s32.totalorder %s25, 1
        %s833 = scalar_select %p832, %s25, 1
        %s834 = smul.addr %s833, 8
        %s835 = scalar_lea.vmem %s9, %s834
        // Predicated region
        $region77: #{tpu_custom_call.1} parent=55 // pred_check
          %p836 = pneg %p237
        $region78: #{tpu_custom_call.1} parent=55 // pred_check_branch
          %838 = sbr.rel (%p836) target = $region80
        $region79: #{tpu_custom_call.1} parent=55 // pred_region
          _
        $region80: #{tpu_custom_call.1} parent=55 // pred_fallthru
          _
      $region56: #{tpu_custom_call.1} parent=5 // pred_fallthru
        _
      %p839 = scmp.le.s32.totalorder 2, %s20
      // Predicated region
      $region81: #{tpu_custom_call.1} parent=5 // pred_check
        %p840 = pneg %p839
      $region82: #{tpu_custom_call.1} parent=5 // pred_check_branch
        %842 = sbr.rel (%p840) target = $region84
      $region83: #{tpu_custom_call.1} parent=5 // pred_region
        %s843 = ssub.s32 %s20, 2
        // Predicated region
        $region85: #{tpu_custom_call.1} parent=83 // pred_check
          %p844 = pneg %p243
        $region86: #{tpu_custom_call.1} parent=83 // pred_check_branch
          %846 = sbr.rel (%p844) target = $region88
        $region87: #{tpu_custom_call.1} parent=83 // pred_region
          %p847 = scmp.lt.s32.totalorder %s26, 1
          %s848 = scalar_select %p847, %s26, 1
          %s849 = smul.addr %s848, 8
          %s850 = scalar_lea.vmem %s9, %s849
        $region88: #{tpu_custom_call.1} parent=83 // pred_fallthru
          _
      $region84: #{tpu_custom_call.1} parent=5 // pred_fallthru
        _
    $region6: #{tpu_custom_call.1} parent=1 // loop_footer
      %s24 = sadd.s32 1, %s20
    $region7: #{tpu_custom_call.1} parent=1 // loop_footer_branch
      %19 = sbr.rel target = $region3
    $region8: #{tpu_custom_call.1} parent=1 // loop_exit
      _
    %851 = vsyncpa [#allocation3], 1
    %s852 = scalar_lea.sflag [#allocation3], 1
    %853 = vsyncpa %s852, 1
    %854 = vsyncpa [#allocation5], 1
    %855 = vsyncpa [#allocation8], 1

</llo_original>
